<compile_context>
chip_gen: v5e
topology: v5e:2x2
jax: 0.10.0
libtpu: 0.0.40
codegen_flags: <defaults>
</compile_context>

<pallas_src>
import jax
import jax.numpy as jnp
from jax.experimental import pallas as pl
from jax.experimental.pallas import tpu as pltpu


def _round_up(x, m):
    return (x + m - 1) // m * m


def make_mlp_kernel(num_layers, nc_valid, compute_dtype):
    """Kernel with refs = (x_tile, w0, b0, w1, b1, ..., out_tile).

    x arrives as float32 rows straight from HBM; it is cast to bf16 only as the
    MXU operand.  Bias add + ReLU run on the f32 accumulator; the activation is
    cast back to bf16 only when it feeds the next dot.  Output is stored bf16.
    """

    def kernel(*refs):
        x_ref = refs[0]
        o_ref = refs[-1]
        h = x_ref[...].astype(compute_dtype)          # f32 HBM read -> bf16 MXU operand
        for layer in range(num_layers):
            w_ref = refs[1 + 2 * layer]
            b_ref = refs[2 + 2 * layer]
            if layer == 0:
                # Only the first N*C input features are real; the remaining W0
                # rows would multiply the zero-padded set slots, so dropping
                # them (static slice of the VMEM-resident block) is exact.
                w = w_ref[:nc_valid, :]
            else:
                w = w_ref[...]
            acc = jnp.dot(h, w, preferred_element_type=jnp.float32)
            acc = acc + b_ref[...]                    # f32 bias add (VPU)
            if layer != num_layers - 1:               # nn.Sequential drops the last ReLU
                acc = jnp.maximum(acc, 0.0)           # f32 ReLU
                h = acc.astype(compute_dtype)         # bf16 for the next MXU pass
            else:
                h = acc
        o_ref[...] = h.astype(o_ref.dtype)            # bf16 writeback

    return kernel


class SetPartitionMLPPallas:
    """JAX/Pallas port of the PyTorch SetPartitionMLP module."""

    def __init__(self, params, in_features=10, key=None, compute_dtype=jnp.bfloat16):
        assert params[-1] == 15 ** 2
        if key is None:
            key = jax.random.PRNGKey(0)
        self.in_features = in_features
        self.compute_dtype = compute_dtype
        dims = [in_features * 15] + list(params)
        self.dims = dims
        # Layer-0 input width stays unpadded (150); every layer OUTPUT width is
        # padded to a lane multiple so activations/outputs are lane-dense.
        self.dims_pad = [dims[0]] + [_round_up(d, 128) for d in dims[1:]]

        # Deterministic init mimicking torch.nn.Linear default U(-1/sqrt(fan_in), ..).
        self.weights = []
        self.biases = []
        for i in range(len(params)):
            key, wk, bk = jax.random.split(key, 3)
            fan_in = dims[i]
            bound = 1.0 / (fan_in ** 0.5)
            w = jax.random.uniform(wk, (dims[i], dims[i + 1]), jnp.float32, -bound, bound)
            b = jax.random.uniform(bk, (dims[i + 1],), jnp.float32, -bound, bound)
            self.weights.append(w)
            self.biases.append(b)

        # Pad operands ONCE here (not per forward): weights in bf16 (halves
        # HBM->VMEM bytes), biases kept f32 (added to the f32 accumulator).
        self.w_padded = []
        self.b_padded = []
        for l, (w, b) in enumerate(zip(self.weights, self.biases)):
            in_rows = dims[0] if l == 0 else self.dims_pad[l]
            w_p = (
                jnp.zeros((in_rows, self.dims_pad[l + 1]), compute_dtype)
                .at[: w.shape[0], : w.shape[1]]
                .set(w.astype(compute_dtype))
            )
            b_p = (
                jnp.zeros((1, self.dims_pad[l + 1]), jnp.float32)
                .at[0, : b.shape[0]]
                .set(b)
            )
            self.w_padded.append(jax.device_put(w_p))
            self.b_padded.append(jax.device_put(b_p))

        # jit the whole forward (pallas_call + crop); retraces only per input shape.
        self._forward = jax.jit(self._forward_impl)

    def _forward_impl(self, x):
        B, N, C = x.shape
        assert C == self.in_features and N <= 15
        cdt = self.compute_dtype
        dims_pad = self.dims_pad
        num_layers = len(self.weights)
        NC = N * C

        # Row-major flatten is layout-preserving (no copy). The kernel reads the
        # f32 rows directly (single HBM pass) — no pad/cast slab, no padded rows.
        x2d = x.reshape(B, NC)

        # Batch tiling: large tiles amortize per-grid-step overhead; >= 2 tiles
        # whenever B > 8 so the "parallel" batch axis can use both TensorCores
        # on v7x.  TB is a multiple of 8 (or equals B for tiny B), so block
        # shapes satisfy the (8,128)/full-dim rule; the last block may be
        # partial — Pallas masks its writes.
        if B <= 8:
            TB = B
        else:
            TB = min(2048, _round_up(pl.cdiv(B, 2), 8))
        num_tiles = pl.cdiv(B, TB)

        kernel = make_mlp_kernel(num_layers, NC, cdt)

        args = [x2d]
        in_specs = [pl.BlockSpec((TB, NC), lambda i: (i, 0))]
        for w_p, b_p in zip(self.w_padded, self.b_padded):
            args += [w_p, b_p]
            in_specs += [
                pl.BlockSpec(w_p.shape, lambda i: (0, 0)),  # DMA'd once, VMEM-resident
                pl.BlockSpec(b_p.shape, lambda i: (0, 0)),  # DMA'd once, VMEM-resident
            ]
        out_specs = pl.BlockSpec((TB, dims_pad[-1]), lambda i: (i, 0))

        flops = 2 * B * (
            NC * dims_pad[1]
            + sum(dims_pad[l] * dims_pad[l + 1] for l in range(1, num_layers))
        )
        bytes_accessed = (
            x2d.size * x2d.dtype.itemsize                 # f32 input read
            + B * dims_pad[-1] * 2                        # bf16 output write
            + sum(int(a.size) * a.dtype.itemsize for a in args[1:])
        )

        out = pl.pallas_call(
            kernel,
            out_shape=jax.ShapeDtypeStruct((B, dims_pad[-1]), cdt),  # bf16 writeback
            grid=(num_tiles,),
            in_specs=in_specs,
            out_specs=out_specs,
            compiler_params=pltpu.CompilerParams(
                dimension_semantics=("parallel",),   # shard batch tiles across TCs (v7x)
                vmem_limit_bytes=32 * 1024 * 1024,   # explicit (v5e default is 16 MiB)
            ),
            cost_estimate=pl.CostEstimate(
                flops=flops, transcendentals=0, bytes_accessed=bytes_accessed
            ),
        )(*args)

        # Crop 225 lanes -> (15,15) in XLA (a sub-128 output last dim inside the
        # kernel would force masked partial stores); row-major reshape matches
        # .view(B,15,15); crop to (N,N), add head dim, return f32 like PyTorch.
        edge_vals = out[:, :225].reshape(B, 15, 15)[:, :N, :N][:, None]
        return edge_vals.astype(jnp.float32)

    def __call__(self, x):
        return self._forward(x)


if __name__ == "__main__":
    key = jax.random.PRNGKey(0)
    B, N, C = 2, 8, 10          # x: (B, N, C) with C == in_features, N <= 15
    params = [64, 225]          # hidden width 64, final layer must be 15**2

    xkey, mkey = jax.random.split(key)
    x = jax.random.normal(xkey, (B, N, C), jnp.float32)

    model = SetPartitionMLPPallas(params, in_features=C, key=mkey)
    out = jax.block_until_ready(model(x))
    assert out.shape == (B, 1, N, N), out.shape

    # Pure-JAX references.
    new_x = jnp.zeros((B, 15, C), jnp.float32).at[:, :N].set(x).reshape(B, 15 * C)

    # (a) f32 spec reference (PyTorch semantics) -- relaxed tol: bf16 MXU
    #     operands and bf16 final store.
    h32 = new_x
    for l, (w, b) in enumerate(zip(model.weights, model.biases)):
        h32 = h32 @ w + b
        if l != len(model.weights) - 1:
            h32 = jnp.maximum(h32, 0.0)
    ref32 = h32.reshape(B, 15, 15)[:, :N, :N][:, None]
    assert jnp.allclose(out, ref32, atol=5e-2, rtol=5e-2)

    # (b) bf16-matched reference (same quantization points as the kernel,
    #     including the final bf16 store) -- ~1e-2 tol per review guidance.
    hb = new_x.astype(jnp.bfloat16).astype(jnp.float32)
    for l, (w, b) in enumerate(zip(model.weights, model.biases)):
        wb = w.astype(jnp.bfloat16).astype(jnp.float32)
        hb = hb @ wb + b
        if l != len(model.weights) - 1:
            hb = jnp.maximum(hb, 0.0).astype(jnp.bfloat16).astype(jnp.float32)
    hb = hb.astype(jnp.bfloat16).astype(jnp.float32)
    refb = hb.reshape(B, 15, 15)[:, :N, :N][:, None]
    assert jnp.allclose(out, refb, atol=1e-2, rtol=1e-2)

    print("KERNEL_OK")
</pallas_src>

<mosaic_0001>
module attributes {stable_mosaic.version = 11 : i64} {
  func.func @kernel(%arg0: i32, %arg1: memref<2x80xf32, #tpu.memory_space<vmem>>, %arg2: memref<150x128xbf16, #tpu.memory_space<vmem>>, %arg3: memref<1x128xf32, #tpu.memory_space<vmem>>, %arg4: memref<128x256xbf16, #tpu.memory_space<vmem>>, %arg5: memref<1x256xf32, #tpu.memory_space<vmem>>, %arg6: memref<2x256xbf16, #tpu.memory_space<vmem>>) attributes {dimension_semantics = [#tpu.dimension_semantics<parallel>], iteration_bounds = array<i64: 1>, scalar_prefetch = 0 : i64, scratch_operands = 0 : i64, tpu.core_type = #tpu.core_type<tc>, window_params = [{transform_indices = @transform_0, window_bounds = array<i64: 2, 80>}, {pipeline_mode = #tpu.pipeline_mode<synchronous>, transform_indices = @transform_1, window_bounds = array<i64: 150, 128>}, {pipeline_mode = #tpu.pipeline_mode<synchronous>, transform_indices = @transform_2, window_bounds = array<i64: 1, 128>}, {pipeline_mode = #tpu.pipeline_mode<synchronous>, transform_indices = @transform_3, window_bounds = array<i64: 128, 256>}, {pipeline_mode = #tpu.pipeline_mode<synchronous>, transform_indices = @transform_4, window_bounds = array<i64: 1, 256>}, {transform_indices = @transform_5, window_bounds = array<i64: 2, 256>}]} {
    %c0 = arith.constant 0 : index
    %c0_0 = arith.constant 0 : index
    %0 = vector.load %arg1[%c0, %c0_0] : memref<2x80xf32, #tpu.memory_space<vmem>>, vector<2x80xf32>
    %1 = arith.truncf %0 : vector<2x80xf32> to vector<2x80xbf16>
    %c0_1 = arith.constant 0 : index
    %c0_2 = arith.constant 0 : index
    %2 = vector.load %arg2[%c0_1, %c0_2] : memref<150x128xbf16, #tpu.memory_space<vmem>>, vector<80x128xbf16>
    %cst = arith.constant dense<0.000000e+00> : vector<2x128xf32>
    %3 = tpu.matmul %1, %2, %cst {dimension_numbers = #tpu.dot_dimension_numbers<[1], [0], [0], [1], [0, 0, 1, 1], [], []>} : vector<2x80xbf16>, vector<80x128xbf16>, vector<2x128xf32> -> vector<2x128xf32>
    %c0_3 = arith.constant 0 : index
    %c0_4 = arith.constant 0 : index
    %4 = vector.load %arg3[%c0_3, %c0_4] : memref<1x128xf32, #tpu.memory_space<vmem>>, vector<1x128xf32>
    %5 = vector.broadcast %4 : vector<1x128xf32> to vector<2x128xf32>
    %6 = arith.addf %3, %5 : vector<2x128xf32>
    %cst_5 = arith.constant 0.000000e+00 : f32
    %7 = vector.broadcast %cst_5 : f32 to vector<2x128xf32>
    %8 = arith.maximumf %6, %7 : vector<2x128xf32>
    %9 = arith.truncf %8 : vector<2x128xf32> to vector<2x128xbf16>
    %c0_6 = arith.constant 0 : index
    %c0_7 = arith.constant 0 : index
    %10 = vector.load %arg4[%c0_6, %c0_7] : memref<128x256xbf16, #tpu.memory_space<vmem>>, vector<128x256xbf16>
    %cst_8 = arith.constant dense<0.000000e+00> : vector<2x256xf32>
    %11 = tpu.matmul %9, %10, %cst_8 {dimension_numbers = #tpu.dot_dimension_numbers<[1], [0], [0], [1], [0, 0, 1, 1], [], []>} : vector<2x128xbf16>, vector<128x256xbf16>, vector<2x256xf32> -> vector<2x256xf32>
    %c0_9 = arith.constant 0 : index
    %c0_10 = arith.constant 0 : index
    %12 = vector.load %arg5[%c0_9, %c0_10] : memref<1x256xf32, #tpu.memory_space<vmem>>, vector<1x256xf32>
    %13 = vector.broadcast %12 : vector<1x256xf32> to vector<2x256xf32>
    %14 = arith.addf %11, %13 : vector<2x256xf32>
    %15 = arith.truncf %14 : vector<2x256xf32> to vector<2x256xbf16>
    %c0_11 = arith.constant 0 : index
    %c0_12 = arith.constant 0 : index
    %16 = vector.load %arg6[%c0_11, %c0_12] : memref<2x256xbf16, #tpu.memory_space<vmem>>, vector<2x256xbf16>
    tpu.vector_store %arg6[%c0_11, %c0_12], %15 {strides = array<i32>} : memref<2x256xbf16, #tpu.memory_space<vmem>>, vector<2x256xbf16>,
    return
  }
  func.func @transform_0(%arg0: i32) -> (i32, i32) {
    %c0_i32 = arith.constant 0 : i32
    %c0_i32_0 = arith.constant 0 : i32
    return %arg0, %c0_i32 : i32, i32
  }
  func.func @transform_1(%arg0: i32) -> (i32, i32) {
    %c0_i32 = arith.constant 0 : i32
    %c0_i32_0 = arith.constant 0 : i32
    %c0_i32_1 = arith.constant 0 : i32
    return %c0_i32, %c0_i32_0 : i32, i32
  }
  func.func @transform_2(%arg0: i32) -> (i32, i32) {
    %c0_i32 = arith.constant 0 : i32
    %c0_i32_0 = arith.constant 0 : i32
    %c0_i32_1 = arith.constant 0 : i32
    return %c0_i32, %c0_i32_0 : i32, i32
  }
  func.func @transform_3(%arg0: i32) -> (i32, i32) {
    %c0_i32 = arith.constant 0 : i32
    %c0_i32_0 = arith.constant 0 : i32
    %c0_i32_1 = arith.constant 0 : i32
    return %c0_i32, %c0_i32_0 : i32, i32
  }
  func.func @transform_4(%arg0: i32) -> (i32, i32) {
    %c0_i32 = arith.constant 0 : i32
    %c0_i32_0 = arith.constant 0 : i32
    %c0_i32_1 = arith.constant 0 : i32
    return %c0_i32, %c0_i32_0 : i32, i32
  }
  func.func @transform_5(%arg0: i32) -> (i32, i32) {
    %c0_i32 = arith.constant 0 : i32
    %c0_i32_0 = arith.constant 0 : i32
    return %arg0, %c0_i32 : i32, i32
  }
}

</mosaic_0001>

<llo_original>
// kernel: _forward_impl.1
$region0: #{_forward_impl.1}
  #allocation0 [shape = 'u32[]', space=smem, size = 0x4, offset = 0x4, fixed_abs, tag = 'smem constant byte address 0x4 - core index']
  #allocation1 [shape = 'u32[72,128]{1,0:T(1,128)}', space=vmem, size = 0x9000, scoped, tag = 'internal scratch']
  %s0 = inlined_call_operand.vmem [shape: f32[2,80], index: 0, kind: input, shape index: {}]
  %s1 = inlined_call_operand.hbm [shape: bf16[150,128], index: 1, kind: input, shape index: {}]
  %s2 = inlined_call_operand.vmem [shape: f32[1,128], index: 2, kind: input, shape index: {}]
  %s3 = inlined_call_operand.hbm [shape: bf16[128,256], index: 3, kind: input, shape index: {}]
  %s4 = inlined_call_operand.vmem [shape: f32[1,256], index: 4, kind: input, shape index: {}]
  %s5 = inlined_call_operand.vmem [shape: bf16[2,256], index: 5, kind: output, shape index: {}]
  %s6 = sld [smem:[#allocation0]]
  $region38: #{_forward_impl.1} parent=0
    _
  %s8 = ssub.s32 1, %s6
  %s9 = scalar_select 0, %s8, %s6
  $region1: #{_forward_impl.1} parent=0
    #allocation2 [shape = 'u8[38912]{0}', space=vmem, size = 0x9800, scoped, tag = 'input window, operand 1, single buffered']
    #allocation3 [shape = 's32[1]{0}', space=sflag, size = 0x4, scoped, tag = 'scoped memory for _forward_impl.1']
    #allocation4 [shape = 'u8[65536]{0}', space=vmem, size = 0x10000, scoped, tag = 'input window, operand 3, single buffered']
    #allocation5 [shape = 's32[1]{0}', space=sflag, size = 0x4, scoped, tag = 'scoped memory for _forward_impl.1']
    %10 = vsyncpa [#allocation3], 0
    %11 = vsyncpa [#allocation5], 0
    // Predicated region
    $region2: #{_forward_impl.1} parent=1 // pred_check
      _
    $region3: #{_forward_impl.1} parent=1 // pred_check_branch
      %13 = sbr.rel (0) target = $region5
    $region4: #{_forward_impl.1} parent=1 // pred_region
      _
    $region5: #{_forward_impl.1} parent=1 // pred_fallthru
      _
    // Predicated region
    $region6: #{_forward_impl.1} parent=1 // pred_check
      _
    $region7: #{_forward_impl.1} parent=1 // pred_check_branch
      %15 = sbr.rel (0) target = $region9
    $region8: #{_forward_impl.1} parent=1 // pred_region
      %17 = vsyncadd [#allocation3], 0
      %s18 = sshll.u32 %s1, 4
      %s19 = int_to_ptr.hbm [resolvable:$true] %s18
      %s20 = sshll.u32 [#allocation2], 4
      %s21 = int_to_ptr.vmem [resolvable:$true] %s20
      %26 = dma.hbm_to_vmem [thread:$0]  %s19, 1216, %s21, [#allocation3], 64, 64, 4
    $region9: #{_forward_impl.1} parent=1 // pred_fallthru
      _
    // Predicated region
    $region10: #{_forward_impl.1} parent=1 // pred_check
      _
    $region11: #{_forward_impl.1} parent=1 // pred_check_branch
      %28 = sbr.rel (0) target = $region13
    $region12: #{_forward_impl.1} parent=1 // pred_region
      _
    $region13: #{_forward_impl.1} parent=1 // pred_fallthru
      _
    // Predicated region
    $region14: #{_forward_impl.1} parent=1 // pred_check
      _
    $region15: #{_forward_impl.1} parent=1 // pred_check_branch
      %30 = sbr.rel (0) target = $region17
    $region16: #{_forward_impl.1} parent=1 // pred_region
      %32 = vsyncadd [#allocation5], 0
      %s33 = sshll.u32 %s3, 4
      %s34 = int_to_ptr.hbm [resolvable:$true] %s33
      %s35 = sshll.u32 [#allocation4], 4
      %s36 = int_to_ptr.vmem [resolvable:$true] %s35
      %41 = dma.hbm_to_vmem [thread:$0]  %s34, 2048, %s36, [#allocation5], 128, 128, 8
    $region17: #{_forward_impl.1} parent=1 // pred_fallthru
      _
    // Predicated region
    $region18: #{_forward_impl.1} parent=1 // pred_check
      _
    $region19: #{_forward_impl.1} parent=1 // pred_check_branch
      %43 = sbr.rel (0) target = $region21
    $region20: #{_forward_impl.1} parent=1 // pred_region
      _
    $region21: #{_forward_impl.1} parent=1 // pred_fallthru
      _
    // Predicated region
    $region22: #{_forward_impl.1} parent=1 // pred_check
      _
    $region23: #{_forward_impl.1} parent=1 // pred_check_branch
      %45 = sbr.rel (0) target = $region25
    $region24: #{_forward_impl.1} parent=1 // pred_region
      %47 = dma.done [#allocation3], 1216
    $region25: #{_forward_impl.1} parent=1 // pred_fallthru
      _
    // Predicated region
    $region26: #{_forward_impl.1} parent=1 // pred_check
      _
    $region27: #{_forward_impl.1} parent=1 // pred_check_branch
      %49 = sbr.rel (0) target = $region29
    $region28: #{_forward_impl.1} parent=1 // pred_region
      %51 = dma.done [#allocation5], 2048
    $region29: #{_forward_impl.1} parent=1 // pred_fallthru
      _
    %v53 = vld [vmem:[%s0] sm:$0x3]
    %v54 = vpack.c.bf16 %v53, %v53
    %v55 = vld [vmem:[#allocation2] sm:$0xf]
    %v56 = vld [vmem:[#allocation2 + $0x4] sm:$0xf]
    %v57 = vld [vmem:[#allocation2 + $0x8] sm:$0xf]
    %v58 = vld [vmem:[#allocation2 + $0xc] sm:$0xf]
    %v59 = vld [vmem:[#allocation2 + $0x10] sm:$0xf]
    %v60 = vld [vmem:[#allocation2 + $0x14] sm:$0xf]
    %v61 = vld [vmem:[#allocation2 + $0x18] sm:$0xf]
    %v62 = vld [vmem:[#allocation2 + $0x1c] sm:$0xf]
    %v63 = vld [vmem:[#allocation2 + $0x20] sm:$0xf]
    %v64 = vld [vmem:[#allocation2 + $0x24] sm:$0xf]
    %v65 = vld [vmem:[%s2] sm:$0x1]
    %v67 = vperm.slane %v65, 0
    %v79 = vunpack.c.l.b16 %v55
    %v80 = vunpack.c.l.b16 %v56
    %v81 = vunpack.c.l.b16 %v57
    %v82 = vunpack.c.l.b16 %v58
    %v83 = vunpack.c.l.b16 %v59
    %v84 = vunpack.c.l.b16 %v60
    %v85 = vunpack.c.l.b16 %v61
    %v86 = vunpack.c.l.b16 %v62
    %v87 = vunpack.c.l.b16 %v63
    %v88 = vunpack.c.l.b16 %v64
    %v89 = vpack.c.b16 %v80, %v79
    %v90 = vpack.c.b16 %v82, %v81
    %v91 = vpack.c.b16 %v84, %v83
    %v92 = vpack.c.b16 %v86, %v85
    %v93 = vpack.c.b16 %v88, %v87
    %vm99 = vcmask 654336
    %v101 = vsel %vm99, %v54, 0
    %103 = vmatpush.bf16.msra.mxu0 0
    %104 = vmatpush.bf16.msra.mxu0 0
    %105 = vmatpush.bf16.msra.mxu0 0
    %106 = vmatpush.bf16.msra.mxu0 %v93
    %107 = vmatpush.bf16.msra.mxu0 %v92
    %108 = vmatpush.bf16.msra.mxu0 %v91
    %109 = vmatpush.bf16.msra.mxu0 %v90
    %110 = vmatpush.bf16.msra.mxu0 %v89
    %111 = vmatmul.bf16.gmra.mxu0 %v101
    %v112 = vpop.f32.mrf.mxu0
    %v113 = vadd.f32 %v67, %v112
    %v114 = vpop.f32.mrf.mxu0
    %115 = vdwg.mxu0
    %v116 = vmax.f32 %v113, 0.0
    %v117 = vpack.c.bf16 %v116, %v116
    %v118 = vld [vmem:[#allocation4] sm:$0xff]
    %v119 = vld [vmem:[#allocation4 + $0x8] sm:$0xff]
    %v120 = vld [vmem:[#allocation4 + $0x10] sm:$0xff]
    %v121 = vld [vmem:[#allocation4 + $0x18] sm:$0xff]
    %v122 = vld [vmem:[#allocation4 + $0x20] sm:$0xff]
    %v123 = vld [vmem:[#allocation4 + $0x28] sm:$0xff]
    %v124 = vld [vmem:[#allocation4 + $0x30] sm:$0xff]
    %v125 = vld [vmem:[#allocation4 + $0x38] sm:$0xff]
    %v126 = vld [vmem:[#allocation4 + $0x40] sm:$0xff]
    %v127 = vld [vmem:[#allocation4 + $0x48] sm:$0xff]
    %v128 = vld [vmem:[#allocation4 + $0x50] sm:$0xff]
    %v129 = vld [vmem:[#allocation4 + $0x58] sm:$0xff]
    %v130 = vld [vmem:[#allocation4 + $0x60] sm:$0xff]
    %v131 = vld [vmem:[#allocation4 + $0x68] sm:$0xff]
    %v132 = vld [vmem:[#allocation4 + $0x70] sm:$0xff]
    %v133 = vld [vmem:[#allocation4 + $0x78] sm:$0xff]
    %v134 = vld [vmem:[%s4] sm:$0x3]
    %v136 = vperm.slane %v134, 0
    %v137 = vperm.slane %v134, 1
    %v156 = vunpack.c.l.b16 %v118
    %v157 = vunpack.c.h.b16 %v118
    %v158 = vunpack.c.l.b16 %v119
    %v159 = vunpack.c.h.b16 %v119
    %v160 = vunpack.c.l.b16 %v120
    %v161 = vunpack.c.h.b16 %v120
    %v162 = vunpack.c.l.b16 %v121
    %v163 = vunpack.c.h.b16 %v121
    %v164 = vunpack.c.l.b16 %v122
    %v165 = vunpack.c.h.b16 %v122
    %v166 = vunpack.c.l.b16 %v123
    %v167 = vunpack.c.h.b16 %v123
    %v168 = vunpack.c.l.b16 %v124
    %v169 = vunpack.c.h.b16 %v124
    %v170 = vunpack.c.l.b16 %v125
    %v171 = vunpack.c.h.b16 %v125
    %v172 = vunpack.c.l.b16 %v126
    %v173 = vunpack.c.h.b16 %v126
    %v174 = vunpack.c.l.b16 %v127
    %v175 = vunpack.c.h.b16 %v127
    %v176 = vunpack.c.l.b16 %v128
    %v177 = vunpack.c.h.b16 %v128
    %v178 = vunpack.c.l.b16 %v129
    %v179 = vunpack.c.h.b16 %v129
    %v180 = vunpack.c.l.b16 %v130
    %v181 = vunpack.c.h.b16 %v130
    %v182 = vunpack.c.l.b16 %v131
    %v183 = vunpack.c.h.b16 %v131
    %v184 = vunpack.c.l.b16 %v132
    %v185 = vunpack.c.h.b16 %v132
    %v186 = vunpack.c.l.b16 %v133
    %v187 = vunpack.c.h.b16 %v133
    %v188 = vpack.c.b16 %v158, %v156
    %v189 = vpack.c.b16 %v159, %v157
    %v190 = vpack.c.b16 %v162, %v160
    %v191 = vpack.c.b16 %v163, %v161
    %v192 = vpack.c.b16 %v166, %v164
    %v193 = vpack.c.b16 %v167, %v165
    %v194 = vpack.c.b16 %v170, %v168
    %v195 = vpack.c.b16 %v171, %v169
    %v196 = vpack.c.b16 %v174, %v172
    %v197 = vpack.c.b16 %v175, %v173
    %v198 = vpack.c.b16 %v178, %v176
    %v199 = vpack.c.b16 %v179, %v177
    %v200 = vpack.c.b16 %v182, %v180
    %v201 = vpack.c.b16 %v183, %v181
    %v202 = vpack.c.b16 %v186, %v184
    %v203 = vpack.c.b16 %v187, %v185
    %220 = vmatpush.bf16.msra.mxu0 %v202
    %221 = vmatpush.bf16.msra.mxu0 %v200
    %222 = vmatpush.bf16.msra.mxu0 %v198
    %223 = vmatpush.bf16.msra.mxu0 %v196
    %224 = vmatpush.bf16.msra.mxu0 %v194
    %225 = vmatpush.bf16.msra.mxu0 %v192
    %226 = vmatpush.bf16.msra.mxu0 %v190
    %227 = vmatpush.bf16.msra.mxu0 %v188
    %228 = vmatmul.bf16.gmra.mxu0 %v117
    %v229 = vpop.f32.mrf.mxu0
    %v230 = vadd.f32 %v136, %v229
    %v231 = vpop.f32.mrf.mxu0
    %232 = vdwg.mxu0
    %233 = vmatpush.bf16.msra.mxu0 %v203
    %234 = vmatpush.bf16.msra.mxu0 %v201
    %235 = vmatpush.bf16.msra.mxu0 %v199
    %236 = vmatpush.bf16.msra.mxu0 %v197
    %237 = vmatpush.bf16.msra.mxu0 %v195
    %238 = vmatpush.bf16.msra.mxu0 %v193
    %239 = vmatpush.bf16.msra.mxu0 %v191
    %240 = vmatpush.bf16.msra.mxu0 %v189
    %241 = vmatmul.bf16.gmra.mxu0 %v117
    %v242 = vpop.f32.mrf.mxu0
    %v243 = vadd.f32 %v137, %v242
    %v244 = vpop.f32.mrf.mxu0
    %245 = vdwg.mxu0
    %v246 = vpack.c.bf16 %v243, %v230
    %v248 = vrot.slane %v246, 3
    %vm249 = vcmask 1040384
    %v252 = vsel %vm249, %v246, %v248
    %254 = vst [vmem:[%s5] sm:$0x3] %v252
    // Predicated region
    $region30: #{_forward_impl.1} parent=1 // pred_check
      _
    $region31: #{_forward_impl.1} parent=1 // pred_check_branch
      %256 = sbr.rel (0) target = $region33
    $region32: #{_forward_impl.1} parent=1 // pred_region
      _
    $region33: #{_forward_impl.1} parent=1 // pred_fallthru
      _
    // Predicated region
    $region34: #{_forward_impl.1} parent=1 // pred_check
      _
    $region35: #{_forward_impl.1} parent=1 // pred_check_branch
      %258 = sbr.rel (0) target = $region37
    $region36: #{_forward_impl.1} parent=1 // pred_region
      _
    $region37: #{_forward_impl.1} parent=1 // pred_fallthru
      _
    %259 = vsyncpa [#allocation3], 1
    %260 = vsyncpa [#allocation5], 1

</llo_original>
